<compile_context>
chip_gen: v7x
topology: tpu7x:2x2x1
jax: 0.10.0
libtpu: 0.0.40
codegen_flags: <defaults>
</compile_context>

<pallas_src>
import jax
import jax.numpy as jnp
from jax.experimental import pallas as pl
from jax.experimental.pallas import tpu as pltpu

IN_FEATURES = 4     # Titanic features after drops: Age, SibSp, Parch, Fare
H1 = 64
H2 = 100            # logical hidden size of fc2 (matches the PyTorch module)
H2_PAD = 128        # lane-padded hidden size actually used in the kernel
OUT = 2


def _round_up(n, m):
    return ((n + m - 1) // m) * m


def _mlp_kernel(xT_ref, w1_ref, b1_ref, w2_ref, b2_ref, wd_ref, bd_ref, oT_ref):
    # Batch-in-lanes: every activation has the batch tile as its last (lane) dim.
    xT = xT_ref[...]                                                        # (4, TB) bf16

    # fc1 + ReLU : (64,4) @ (4,TB) -> (64,TB), f32 accumulation
    h1 = jnp.dot(w1_ref[...], xT, preferred_element_type=jnp.float32) + b1_ref[...]
    h1 = jnp.maximum(h1, 0.0).astype(jnp.bfloat16)

    # fc2 + ReLU : (128,64) @ (64,TB) -> (128,TB)   (hidden 100 zero-padded to 128)
    h2 = jnp.dot(w2_ref[...], h1, preferred_element_type=jnp.float32) + b2_ref[...]
    h2 = jnp.maximum(h2, 0.0).astype(jnp.bfloat16)

    # fc3 + 2-class softmax fused into a single matvec:
    #   d  = (w3[0]-w3[1]) @ h2 + (b3[0]-b3[1])   -> (1, TB)
    #   p0 = sigmoid(d) = exp(l0)/(exp(l0)+exp(l1)),  p1 = 1 - p0
    d = jnp.dot(wd_ref[...], h2, preferred_element_type=jnp.float32) + bd_ref[...]
    p0 = 1.0 / (1.0 + jnp.exp(-d))                                          # (1, TB) f32
    oT_ref[0:1, :] = p0
    oT_ref[1:2, :] = 1.0 - p0


def titanic_net_forward(x, kparams, *, tile_batch=2048):
    """x: (B, 4) float32; kparams: output of prepare_kernel_params().

    Returns softmax probabilities of shape (B, 2), identical to the PyTorch Net
    (up to bf16 weight precision).
    """
    B = x.shape[0]
    w1, b1, w2, b2, wd, bd = (kparams["w1"], kparams["b1"], kparams["w2"],
                              kparams["b2"], kparams["wd"], kparams["bd"])

    # Batch tile is the lane dim of every block -> multiple of 128.  TB=2048 keeps
    # live intermediates (h1/h2 ~1.2 KiB per row -> ~2.5 MiB) far below the 32 MiB
    # scoped-VMEM default on every generation (incl. v7x's 64 MiB physical VMEM),
    # so no vmem_limit_bytes override is needed.  For very large B, a grid with
    # >= 2 steps lets v7x's two TensorCores split the work via "parallel".
    TB = min(tile_batch, _round_up(B, 128))
    B_pad = _round_up(B, TB)

    # Pad batch, transpose to feature-major, cast to bf16 (halves x HBM bytes).
    xT = jnp.pad(x, ((0, B_pad - B), (0, 0))).T.astype(jnp.bfloat16)        # (4, B_pad)

    grid = (B_pad // TB,)
    resident = lambda arr: pl.BlockSpec(arr.shape, lambda i: (0, 0))        # stays in VMEM

    flops = 2 * B_pad * (IN_FEATURES * H1 + H1 * H2_PAD + H2_PAD * 1)
    bytes_accessed = (
        xT.size * 2 + B_pad * OUT * 4
        + (w1.size + w2.size + wd.size) * 2
        + (b1.size + b2.size + bd.size) * 4
    )

    outT = pl.pallas_call(
        _mlp_kernel,
        out_shape=jax.ShapeDtypeStruct((OUT, B_pad), jnp.float32),
        grid=grid,
        in_specs=[
            pl.BlockSpec((IN_FEATURES, TB), lambda i: (0, i)),   # lane-dense x tile
            resident(w1), resident(b1),
            resident(w2), resident(b2),
            resident(wd), resident(bd),
        ],
        out_specs=pl.BlockSpec((OUT, TB), lambda i: (0, i)),     # lane-dense output
        compiler_params=pltpu.CompilerParams(
            dimension_semantics=("parallel",),
        ),
        cost_estimate=pl.CostEstimate(
            flops=flops,
            transcendentals=B_pad,
            bytes_accessed=bytes_accessed,
        ),
    )(xT, w1, b1, w2, b2, wd, bd)

    return outT.T[:B]                                            # (B, 2) f32


def init_params(key):
    """PyTorch-native params: weights (out, in), biases (out,), f32,
    U(-1/sqrt(fan_in), 1/sqrt(fan_in)) like nn.Linear's default init."""
    ks = jax.random.split(key, 6)

    def lin(kw, kb, fan_in, fan_out):
        bound = 1.0 / jnp.sqrt(float(fan_in))
        w = jax.random.uniform(kw, (fan_out, fan_in), jnp.float32, -bound, bound)
        b = jax.random.uniform(kb, (fan_out,), jnp.float32, -bound, bound)
        return w, b

    w1, b1 = lin(ks[0], ks[1], IN_FEATURES, H1)
    w2, b2 = lin(ks[2], ks[3], H1, H2)
    w3, b3 = lin(ks[4], ks[5], H2, OUT)
    return {"w1": w1, "b1": b1, "w2": w2, "b2": b2, "w3": w3, "b3": b3}


def prepare_kernel_params(p):
    """PyTorch-native f32 params -> kernel layout:
       * bf16 weights (MXU-native), f32 column biases,
       * hidden 100 zero-padded to 128 (exact no-op through ReLU / folded fc3),
       * fc3 + softmax folded to a single difference row (w_diff, b_diff)."""
    w1 = p["w1"].astype(jnp.bfloat16)                                        # (64, 4)
    b1 = p["b1"].reshape(H1, 1)                                              # (64, 1) f32
    w2 = jnp.pad(p["w2"], ((0, H2_PAD - H2), (0, 0))).astype(jnp.bfloat16)   # (128, 64)
    b2 = jnp.pad(p["b2"], (0, H2_PAD - H2)).reshape(H2_PAD, 1)               # (128, 1) f32
    wd = jnp.pad(p["w3"][0] - p["w3"][1],
                 (0, H2_PAD - H2)).reshape(1, H2_PAD).astype(jnp.bfloat16)   # (1, 128)
    bd = (p["b3"][0] - p["b3"][1]).reshape(1, 1)                             # (1, 1) f32
    return {"w1": w1, "b1": b1, "w2": w2, "b2": b2, "wd": wd, "bd": bd}


def _reference_forward(x, p):
    """Pure-JAX f32 reference matching the PyTorch module exactly."""
    h1 = jnp.maximum(x @ p["w1"].T + p["b1"], 0.0)
    h2 = jnp.maximum(h1 @ p["w2"].T + p["b2"], 0.0)
    logits = h2 @ p["w3"].T + p["b3"]
    return jax.nn.softmax(logits, axis=-1)


if __name__ == "__main__":
    key = jax.random.PRNGKey(0)
    k_params, k_x = jax.random.split(key)

    params = init_params(k_params)
    kparams = prepare_kernel_params(params)

    batch = 8
    x = jax.random.normal(k_x, (batch, IN_FEATURES), jnp.float32)

    out = titanic_net_forward(x, kparams)
    out = jax.block_until_ready(out)

    # Sanity: shape, softmax rows sum to 1, and match against pure-JAX f32 reference
    # (kernel weights are bf16 -> bf16-level tolerance).
    assert out.shape == (batch, OUT)
    row_sums = jnp.sum(out, axis=-1)
    assert jnp.allclose(row_sums, jnp.ones_like(row_sums), atol=1e-5)
    ref = _reference_forward(x, params)
    assert jnp.allclose(out, ref, atol=1e-2), "mismatch vs pure-JAX reference"

    print("KERNEL_OK")
</pallas_src>

<mosaic_0001>
module attributes {stable_mosaic.version = 11 : i64} {
  func.func @_mlp_kernel(%arg0: i32, %arg1: memref<4x128xbf16, #tpu.memory_space<vmem>>, %arg2: memref<64x4xbf16, #tpu.memory_space<vmem>>, %arg3: memref<64x1xf32, #tpu.memory_space<vmem>>, %arg4: memref<128x64xbf16, #tpu.memory_space<vmem>>, %arg5: memref<128x1xf32, #tpu.memory_space<vmem>>, %arg6: memref<1x128xbf16, #tpu.memory_space<vmem>>, %arg7: memref<1x1xf32, #tpu.memory_space<vmem>>, %arg8: memref<2x128xf32, #tpu.memory_space<vmem>>) attributes {dimension_semantics = [#tpu.dimension_semantics<parallel>], iteration_bounds = array<i64: 1>, scalar_prefetch = 0 : i64, scratch_operands = 0 : i64, tpu.core_type = #tpu.core_type<tc>, window_params = [{transform_indices = @transform_0, window_bounds = array<i64: 4, 128>}, {pipeline_mode = #tpu.pipeline_mode<synchronous>, transform_indices = @transform_1, window_bounds = array<i64: 64, 4>}, {pipeline_mode = #tpu.pipeline_mode<synchronous>, transform_indices = @transform_2, window_bounds = array<i64: 64, 1>}, {pipeline_mode = #tpu.pipeline_mode<synchronous>, transform_indices = @transform_3, window_bounds = array<i64: 128, 64>}, {pipeline_mode = #tpu.pipeline_mode<synchronous>, transform_indices = @transform_4, window_bounds = array<i64: 128, 1>}, {pipeline_mode = #tpu.pipeline_mode<synchronous>, transform_indices = @transform_5, window_bounds = array<i64: 1, 128>}, {pipeline_mode = #tpu.pipeline_mode<synchronous>, transform_indices = @transform_6, window_bounds = array<i64: 1, 1>}, {transform_indices = @transform_7, window_bounds = array<i64: 2, 128>}]} {
    %c0 = arith.constant 0 : index
    %c0_0 = arith.constant 0 : index
    %0 = vector.load %arg1[%c0, %c0_0] : memref<4x128xbf16, #tpu.memory_space<vmem>>, vector<4x128xbf16>
    %c0_1 = arith.constant 0 : index
    %c0_2 = arith.constant 0 : index
    %1 = vector.load %arg2[%c0_1, %c0_2] : memref<64x4xbf16, #tpu.memory_space<vmem>>, vector<64x4xbf16>
    %cst = arith.constant dense<0.000000e+00> : vector<64x128xf32>
    %2 = tpu.matmul %1, %0, %cst {dimension_numbers = #tpu.dot_dimension_numbers<[1], [0], [0], [1], [0, 0, 1, 1], [], []>} : vector<64x4xbf16>, vector<4x128xbf16>, vector<64x128xf32> -> vector<64x128xf32>
    %c0_3 = arith.constant 0 : index
    %c0_4 = arith.constant 0 : index
    %3 = vector.load %arg3[%c0_3, %c0_4] : memref<64x1xf32, #tpu.memory_space<vmem>>, vector<64x1xf32>
    %4 = vector.broadcast %3 : vector<64x1xf32> to vector<64x128xf32>
    %5 = arith.addf %2, %4 : vector<64x128xf32>
    %cst_5 = arith.constant 0.000000e+00 : f32
    %6 = vector.broadcast %cst_5 : f32 to vector<64x128xf32>
    %7 = arith.maximumf %5, %6 : vector<64x128xf32>
    %8 = arith.truncf %7 : vector<64x128xf32> to vector<64x128xbf16>
    %c0_6 = arith.constant 0 : index
    %c0_7 = arith.constant 0 : index
    %9 = vector.load %arg4[%c0_6, %c0_7] : memref<128x64xbf16, #tpu.memory_space<vmem>>, vector<128x64xbf16>
    %cst_8 = arith.constant dense<0.000000e+00> : vector<128x128xf32>
    %10 = tpu.matmul %9, %8, %cst_8 {dimension_numbers = #tpu.dot_dimension_numbers<[1], [0], [0], [1], [0, 0, 1, 1], [], []>} : vector<128x64xbf16>, vector<64x128xbf16>, vector<128x128xf32> -> vector<128x128xf32>
    %c0_9 = arith.constant 0 : index
    %c0_10 = arith.constant 0 : index
    %11 = vector.load %arg5[%c0_9, %c0_10] : memref<128x1xf32, #tpu.memory_space<vmem>>, vector<128x1xf32>
    %12 = vector.broadcast %11 : vector<128x1xf32> to vector<128x128xf32>
    %13 = arith.addf %10, %12 : vector<128x128xf32>
    %cst_11 = arith.constant 0.000000e+00 : f32
    %14 = vector.broadcast %cst_11 : f32 to vector<128x128xf32>
    %15 = arith.maximumf %13, %14 : vector<128x128xf32>
    %16 = arith.truncf %15 : vector<128x128xf32> to vector<128x128xbf16>
    %c0_12 = arith.constant 0 : index
    %c0_13 = arith.constant 0 : index
    %17 = vector.load %arg6[%c0_12, %c0_13] : memref<1x128xbf16, #tpu.memory_space<vmem>>, vector<1x128xbf16>
    %cst_14 = arith.constant dense<0.000000e+00> : vector<1x128xf32>
    %18 = tpu.matmul %17, %16, %cst_14 {dimension_numbers = #tpu.dot_dimension_numbers<[1], [0], [0], [1], [0, 0, 1, 1], [], []>} : vector<1x128xbf16>, vector<128x128xbf16>, vector<1x128xf32> -> vector<1x128xf32>
    %c0_15 = arith.constant 0 : index
    %c0_16 = arith.constant 0 : index
    %19 = vector.load %arg7[%c0_15, %c0_16] : memref<1x1xf32, #tpu.memory_space<vmem>>, vector<1x1xf32>
    %20 = vector.broadcast %19 : vector<1x1xf32> to vector<1x128xf32>
    %21 = arith.addf %18, %20 : vector<1x128xf32>
    %cst_17 = arith.constant 0.000000e+00 : f32
    %22 = vector.broadcast %cst_17 : f32 to vector<1x128xf32>
    %23 = arith.subf %22, %21 : vector<1x128xf32>
    %24 = math.exp %23 : vector<1x128xf32>
    %cst_18 = arith.constant 1.000000e+00 : f32
    %25 = vector.broadcast %cst_18 : f32 to vector<1x128xf32>
    %26 = arith.addf %25, %24 : vector<1x128xf32>
    %cst_19 = arith.constant 1.000000e+00 : f32
    %27 = vector.broadcast %cst_19 : f32 to vector<1x128xf32>
    %28 = arith.divf %27, %26 : vector<1x128xf32>
    %c0_20 = arith.constant 0 : index
    %c0_21 = arith.constant 0 : index
    %29 = vector.load %arg8[%c0_20, %c0_21] : memref<2x128xf32, #tpu.memory_space<vmem>>, vector<1x128xf32>
    tpu.vector_store %arg8[%c0_20, %c0_21], %28 {strides = array<i32>} : memref<2x128xf32, #tpu.memory_space<vmem>>, vector<1x128xf32>,
    %cst_22 = arith.constant 1.000000e+00 : f32
    %30 = vector.broadcast %cst_22 : f32 to vector<1x128xf32>
    %31 = arith.subf %30, %28 : vector<1x128xf32>
    %c1 = arith.constant 1 : index
    %c0_23 = arith.constant 0 : index
    %32 = vector.load %arg8[%c1, %c0_23] : memref<2x128xf32, #tpu.memory_space<vmem>>, vector<1x128xf32>
    tpu.vector_store %arg8[%c1, %c0_23], %31 {strides = array<i32>} : memref<2x128xf32, #tpu.memory_space<vmem>>, vector<1x128xf32>,
    return
  }
  func.func @transform_0(%arg0: i32) -> (i32, i32) {
    %c0_i32 = arith.constant 0 : i32
    %c0_i32_0 = arith.constant 0 : i32
    return %c0_i32, %arg0 : i32, i32
  }
  func.func @transform_1(%arg0: i32) -> (i32, i32) {
    %c0_i32 = arith.constant 0 : i32
    %c0_i32_0 = arith.constant 0 : i32
    %c0_i32_1 = arith.constant 0 : i32
    return %c0_i32, %c0_i32_0 : i32, i32
  }
  func.func @transform_2(%arg0: i32) -> (i32, i32) {
    %c0_i32 = arith.constant 0 : i32
    %c0_i32_0 = arith.constant 0 : i32
    %c0_i32_1 = arith.constant 0 : i32
    return %c0_i32, %c0_i32_0 : i32, i32
  }
  func.func @transform_3(%arg0: i32) -> (i32, i32) {
    %c0_i32 = arith.constant 0 : i32
    %c0_i32_0 = arith.constant 0 : i32
    %c0_i32_1 = arith.constant 0 : i32
    return %c0_i32, %c0_i32_0 : i32, i32
  }
  func.func @transform_4(%arg0: i32) -> (i32, i32) {
    %c0_i32 = arith.constant 0 : i32
    %c0_i32_0 = arith.constant 0 : i32
    %c0_i32_1 = arith.constant 0 : i32
    return %c0_i32, %c0_i32_0 : i32, i32
  }
  func.func @transform_5(%arg0: i32) -> (i32, i32) {
    %c0_i32 = arith.constant 0 : i32
    %c0_i32_0 = arith.constant 0 : i32
    %c0_i32_1 = arith.constant 0 : i32
    return %c0_i32, %c0_i32_0 : i32, i32
  }
  func.func @transform_6(%arg0: i32) -> (i32, i32) {
    %c0_i32 = arith.constant 0 : i32
    %c0_i32_0 = arith.constant 0 : i32
    %c0_i32_1 = arith.constant 0 : i32
    return %c0_i32, %c0_i32_0 : i32, i32
  }
  func.func @transform_7(%arg0: i32) -> (i32, i32) {
    %c0_i32 = arith.constant 0 : i32
    %c0_i32_0 = arith.constant 0 : i32
    return %c0_i32, %arg0 : i32, i32
  }
}

</mosaic_0001>

<llo_original>
// kernel: tpu_custom_call.1
$region0: #{tpu_custom_call.1}
  #allocation0 [shape = 'u32[]', space=smem, size = 0x4, offset = 0x4, fixed_abs, tag = 'smem constant byte address 0x4 - core index']
  #allocation1 [shape = 'u32[144,128]{1,0:T(1,128)}', space=vmem, size = 0x12000, scoped, tag = 'internal scratch']
  #allocation2 [shape = 'f32[1,1]{1,0:T(1,128)S(1)}', space=vmem, size = 0x200, scoped, tag = 'scoped memory for tpu_custom_call.1']
  %s0 = inlined_call_operand.vmem [shape: bf16[4,128], index: 0, kind: input, shape index: {}]
  %s1 = inlined_call_operand.vmem [shape: bf16[64,4], index: 1, kind: input, shape index: {}]
  %s2 = inlined_call_operand.vmem [shape: f32[64,1], index: 2, kind: input, shape index: {}]
  %s3 = inlined_call_operand.vmem [shape: bf16[128,64], index: 3, kind: input, shape index: {}]
  %s4 = inlined_call_operand.vmem [shape: f32[128,1], index: 4, kind: input, shape index: {}]
  %s5 = inlined_call_operand.vmem [shape: bf16[1,128], index: 5, kind: input, shape index: {}]
  %s6 = inlined_call_operand.<no memory space> [shape: f32[1,1], index: 6, kind: input, shape index: {}]
  %s7 = inlined_call_operand.hbm [shape: f32[2,128], index: 7, kind: output, shape index: {}]
  %s8 = sld [smem:[#allocation0]]
  $region38: #{tpu_custom_call.1} parent=0
    _
  %s10 = ssub.s32 1, %s8
  %s11 = scalar_select 0, %s10, %s8
  %v12 = vstv %s6
  %13 = vst [vmem:[#allocation2] sm:$0x1] %v12
  $region1: #{tpu_custom_call.1} parent=0
    #allocation3 [shape = 'u8[1024]{0}', space=vmem, size = 0x400, scoped, tag = 'output window, operand 0, single buffered']
    #allocation4 [shape = 's32[1]{0}', space=sflag, size = 0x4, scoped, tag = 'scoped memory for tpu_custom_call.1']
    %14 = vsyncpa [#allocation4], 0
    // Predicated region
    $region2: #{tpu_custom_call.1} parent=1 // pred_check
      _
    $region3: #{tpu_custom_call.1} parent=1 // pred_check_branch
      %16 = sbr.rel (0) target = $region5
    $region4: #{tpu_custom_call.1} parent=1 // pred_region
      _
    $region5: #{tpu_custom_call.1} parent=1 // pred_fallthru
      _
    // Predicated region
    $region6: #{tpu_custom_call.1} parent=1 // pred_check
      _
    $region7: #{tpu_custom_call.1} parent=1 // pred_check_branch
      %18 = sbr.rel (0) target = $region9
    $region8: #{tpu_custom_call.1} parent=1 // pred_region
      _
    $region9: #{tpu_custom_call.1} parent=1 // pred_fallthru
      _
    // Predicated region
    $region10: #{tpu_custom_call.1} parent=1 // pred_check
      _
    $region11: #{tpu_custom_call.1} parent=1 // pred_check_branch
      %20 = sbr.rel (0) target = $region13
    $region12: #{tpu_custom_call.1} parent=1 // pred_region
      _
    $region13: #{tpu_custom_call.1} parent=1 // pred_fallthru
      _
    // Predicated region
    $region14: #{tpu_custom_call.1} parent=1 // pred_check
      _
    $region15: #{tpu_custom_call.1} parent=1 // pred_check_branch
      %22 = sbr.rel (0) target = $region17
    $region16: #{tpu_custom_call.1} parent=1 // pred_region
      _
    $region17: #{tpu_custom_call.1} parent=1 // pred_fallthru
      _
    // Predicated region
    $region18: #{tpu_custom_call.1} parent=1 // pred_check
      _
    $region19: #{tpu_custom_call.1} parent=1 // pred_check_branch
      %24 = sbr.rel (0) target = $region21
    $region20: #{tpu_custom_call.1} parent=1 // pred_region
      _
    $region21: #{tpu_custom_call.1} parent=1 // pred_fallthru
      _
    // Predicated region
    $region22: #{tpu_custom_call.1} parent=1 // pred_check
      _
    $region23: #{tpu_custom_call.1} parent=1 // pred_check_branch
      %26 = sbr.rel (0) target = $region25
    $region24: #{tpu_custom_call.1} parent=1 // pred_region
      _
    $region25: #{tpu_custom_call.1} parent=1 // pred_fallthru
      _
    // Predicated region
    $region26: #{tpu_custom_call.1} parent=1 // pred_check
      _
    $region27: #{tpu_custom_call.1} parent=1 // pred_check_branch
      %28 = sbr.rel (0) target = $region29
    $region28: #{tpu_custom_call.1} parent=1 // pred_region
      _
    $region29: #{tpu_custom_call.1} parent=1 // pred_fallthru
      _
    %v30 = vld [vmem:[%s0] sm:$0x3]
    %v31 = vld [vmem:[%s1] sm:$0xf]
    %v32 = vld [vmem:[%s1 + $0x4] sm:$0xf]
    %v33 = vld [vmem:[%s1 + $0x8] sm:$0xf]
    %v34 = vld [vmem:[%s1 + $0xc] sm:$0xf]
    %v35 = vld [vmem:[%s1 + $0x10] sm:$0xf]
    %v36 = vld [vmem:[%s1 + $0x14] sm:$0xf]
    %v37 = vld [vmem:[%s1 + $0x18] sm:$0xf]
    %v38 = vld [vmem:[%s1 + $0x1c] sm:$0xf]
    %v39 = vld [vmem:[%s2] sm:$0xff]
    %v40 = vld [vmem:[%s2 + $0x8] sm:$0xff]
    %v41 = vld [vmem:[%s2 + $0x10] sm:$0xff]
    %v42 = vld [vmem:[%s2 + $0x18] sm:$0xff]
    %v43 = vld [vmem:[%s2 + $0x20] sm:$0xff]
    %v44 = vld [vmem:[%s2 + $0x28] sm:$0xff]
    %v45 = vld [vmem:[%s2 + $0x30] sm:$0xff]
    %v46 = vld [vmem:[%s2 + $0x38] sm:$0xff]
    %48 = vset.pattern.permute.xlu0 0
    %49 = vperm.xlu0 %48, %v39
    %v50 = vpop.permute.xlu0 %49
    %53 = vset.pattern.permute.xlu0 0
    %54 = vperm.xlu0 %53, %v40
    %v55 = vpop.permute.xlu0 %54
    %58 = vset.pattern.permute.xlu0 0
    %59 = vperm.xlu0 %58, %v41
    %v60 = vpop.permute.xlu0 %59
    %63 = vset.pattern.permute.xlu0 0
    %64 = vperm.xlu0 %63, %v42
    %v65 = vpop.permute.xlu0 %64
    %68 = vset.pattern.permute.xlu0 0
    %69 = vperm.xlu0 %68, %v43
    %v70 = vpop.permute.xlu0 %69
    %73 = vset.pattern.permute.xlu0 0
    %74 = vperm.xlu0 %73, %v44
    %v75 = vpop.permute.xlu0 %74
    %78 = vset.pattern.permute.xlu0 0
    %79 = vperm.xlu0 %78, %v45
    %v80 = vpop.permute.xlu0 %79
    %83 = vset.pattern.permute.xlu0 0
    %84 = vperm.xlu0 %83, %v46
    %v85 = vpop.permute.xlu0 %84
    %v95 = vunpack.c.l.b16 %v31
    %v96 = vunpack.c.l.b16 %v32
    %v97 = vunpack.c.l.b16 %v33
    %v98 = vunpack.c.l.b16 %v34
    %v99 = vunpack.c.l.b16 %v35
    %v100 = vunpack.c.l.b16 %v36
    %v101 = vunpack.c.l.b16 %v37
    %v102 = vunpack.c.l.b16 %v38
    %v103 = vpack.c.b16 %v96, %v95
    %v104 = vpack.c.b16 %v98, %v97
    %v105 = vpack.c.b16 %v100, %v99
    %v106 = vpack.c.b16 %v102, %v101
    %vm107 = vcmask 31744
    %v109 = vsel %vm107, %v103, 0
    %v112 = vsel %vm107, %v104, 0
    %v115 = vsel %vm107, %v105, 0
    %v118 = vsel %vm107, %v106, 0
    %vm120 = vcmask 1041408
    %v122 = vsel %vm120, %v30, 0
    %124 = vmatprep.subr.bf16.mxu0 0
    %125 = vmatpush1.bf16.msra.mxu0 %v122
    %126 = vmatprep.subr.bf16.mxu0 0
    %127 = vmatpush1.bf16.msra.mxu0 0
    %128 = vmatprep.subr.bf16.mxu0 0
    %129 = vmatpush1.bf16.msra.mxu0 0
    %130 = vmatprep.subr.bf16.mxu0 0
    %131 = vmatpush1.bf16.msra.mxu0 0
    %132 = vmatprep.subr.bf16.mxu0 0
    %133 = vmatpush1.bf16.msra.mxu0 0
    %134 = vmatprep.subr.bf16.mxu0 0
    %135 = vmatpush1.bf16.msra.mxu0 0
    %136 = vmatprep.subr.bf16.mxu0 0
    %137 = vmatpush1.bf16.msra.mxu0 0
    %138 = vmatprep.subr.bf16.mxu0 0
    %139 = vmatpush1.bf16.msra.mxu0 0
    %140 = vmatprep.subr.bf16.mxu0 0
    %141 = vmatpush1.bf16.msra.mxu0 0
    %142 = vmatprep.subr.bf16.mxu0 0
    %143 = vmatpush1.bf16.msra.mxu0 0
    %144 = vmatprep.subr.bf16.mxu0 0
    %145 = vmatpush1.bf16.msra.mxu0 0
    %146 = vmatprep.subr.bf16.mxu0 0
    %147 = vmatpush1.bf16.msra.mxu0 0
    %148 = vmatprep.subr.bf16.mxu0 0
    %149 = vmatpush1.bf16.msra.mxu0 0
    %150 = vmatprep.subr.bf16.mxu0 0
    %151 = vmatpush1.bf16.msra.mxu0 0
    %152 = vmatprep.subr.bf16.mxu0 0
    %153 = vmatpush1.bf16.msra.mxu0 0
    %154 = vmatprep.subr.bf16.mxu0 0
    %155 = vmatpush1.bf16.msra.mxu0 0
    %156 = vmatprep.mubr.bf16.mxu0 0
    %157 = vmatmul.mubr.bf16.gmra.mrb[0].mxu0 %v109
    %v158 = vpop.f32.mrb[0].mxu0
    %v159 = vadd.f32 %v50, %v158
    %v160 = vpop.f32.mrb[0].mxu0
    %v161 = vpop.f32.mrb[0].mxu0
    %v162 = vadd.f32 %v55, %v161
    %v163 = vpop.f32.mrb[0].mxu0
    %164 = vmatprep.mubr.bf16.mxu0 0
    %165 = vmatmul.mubr.bf16.gmra.mrb[0].mxu0 %v112
    %v166 = vpop.f32.mrb[0].mxu0
    %v167 = vadd.f32 %v60, %v166
    %v168 = vpop.f32.mrb[0].mxu0
    %v169 = vpop.f32.mrb[0].mxu0
    %v170 = vadd.f32 %v65, %v169
    %v171 = vpop.f32.mrb[0].mxu0
    %172 = vmatprep.mubr.bf16.mxu0 0
    %173 = vmatmul.mubr.bf16.gmra.mrb[0].mxu0 %v115
    %v174 = vpop.f32.mrb[0].mxu0
    %v175 = vadd.f32 %v70, %v174
    %v176 = vpop.f32.mrb[0].mxu0
    %v177 = vpop.f32.mrb[0].mxu0
    %v178 = vadd.f32 %v75, %v177
    %v179 = vpop.f32.mrb[0].mxu0
    %180 = vmatprep.mubr.bf16.mxu0 0
    %181 = vmatmul.mubr.bf16.gmra.mrb[0].mxu0 %v118
    %v182 = vpop.f32.mrb[0].mxu0
    %v183 = vadd.f32 %v80, %v182
    %v184 = vpop.f32.mrb[0].mxu0
    %v185 = vpop.f32.mrb[0].mxu0
    %v186 = vadd.f32 %v85, %v185
    %v187 = vpop.f32.mrb[0].mxu0
    %188 = vdwg.mxu0
    %v189 = vmax.f32 %v159, 0.0
    %v190 = vmax.f32 %v162, 0.0
    %v191 = vmax.f32 %v167, 0.0
    %v192 = vmax.f32 %v170, 0.0
    %v193 = vmax.f32 %v175, 0.0
    %v194 = vmax.f32 %v178, 0.0
    %v195 = vmax.f32 %v183, 0.0
    %v196 = vmax.f32 %v186, 0.0
    %v197 = vpack.c.bf16 %v190, %v189
    %v198 = vpack.c.bf16 %v192, %v191
    %v199 = vpack.c.bf16 %v194, %v193
    %v200 = vpack.c.bf16 %v196, %v195
    %v201 = vld [vmem:[%s3] sm:$0xf]
    %v202 = vld [vmem:[%s3 + $0x4] sm:$0xf]
    %v203 = vld [vmem:[%s3 + $0x8] sm:$0xf]
    %v204 = vld [vmem:[%s3 + $0xc] sm:$0xf]
    %v205 = vld [vmem:[%s3 + $0x10] sm:$0xf]
    %v206 = vld [vmem:[%s3 + $0x14] sm:$0xf]
    %v207 = vld [vmem:[%s3 + $0x18] sm:$0xf]
    %v208 = vld [vmem:[%s3 + $0x1c] sm:$0xf]
    %v209 = vld [vmem:[%s3 + $0x20] sm:$0xf]
    %v210 = vld [vmem:[%s3 + $0x24] sm:$0xf]
    %v211 = vld [vmem:[%s3 + $0x28] sm:$0xf]
    %v212 = vld [vmem:[%s3 + $0x2c] sm:$0xf]
    %v213 = vld [vmem:[%s3 + $0x30] sm:$0xf]
    %v214 = vld [vmem:[%s3 + $0x34] sm:$0xf]
    %v215 = vld [vmem:[%s3 + $0x38] sm:$0xf]
    %v216 = vld [vmem:[%s3 + $0x3c] sm:$0xf]
    %v217 = vld [vmem:[%s4] sm:$0xff]
    %v218 = vld [vmem:[%s4 + $0x8] sm:$0xff]
    %v219 = vld [vmem:[%s4 + $0x10] sm:$0xff]
    %v220 = vld [vmem:[%s4 + $0x18] sm:$0xff]
    %v221 = vld [vmem:[%s4 + $0x20] sm:$0xff]
    %v222 = vld [vmem:[%s4 + $0x28] sm:$0xff]
    %v223 = vld [vmem:[%s4 + $0x30] sm:$0xff]
    %v224 = vld [vmem:[%s4 + $0x38] sm:$0xff]
    %v225 = vld [vmem:[%s4 + $0x40] sm:$0xff]
    %v226 = vld [vmem:[%s4 + $0x48] sm:$0xff]
    %v227 = vld [vmem:[%s4 + $0x50] sm:$0xff]
    %v228 = vld [vmem:[%s4 + $0x58] sm:$0xff]
    %v229 = vld [vmem:[%s4 + $0x60] sm:$0xff]
    %v230 = vld [vmem:[%s4 + $0x68] sm:$0xff]
    %v231 = vld [vmem:[%s4 + $0x70] sm:$0xff]
    %v232 = vld [vmem:[%s4 + $0x78] sm:$0xff]
    %234 = vset.pattern.permute.xlu0 0
    %235 = vperm.xlu0 %234, %v217
    %v236 = vpop.permute.xlu0 %235
    %239 = vset.pattern.permute.xlu0 0
    %240 = vperm.xlu0 %239, %v218
    %v241 = vpop.permute.xlu0 %240
    %244 = vset.pattern.permute.xlu0 0
    %245 = vperm.xlu0 %244, %v219
    %v246 = vpop.permute.xlu0 %245
    %249 = vset.pattern.permute.xlu0 0
    %250 = vperm.xlu0 %249, %v220
    %v251 = vpop.permute.xlu0 %250
    %254 = vset.pattern.permute.xlu0 0
    %255 = vperm.xlu0 %254, %v221
    %v256 = vpop.permute.xlu0 %255
    %259 = vset.pattern.permute.xlu0 0
    %260 = vperm.xlu0 %259, %v222
    %v261 = vpop.permute.xlu0 %260
    %264 = vset.pattern.permute.xlu0 0
    %265 = vperm.xlu0 %264, %v223
    %v266 = vpop.permute.xlu0 %265
    %269 = vset.pattern.permute.xlu0 0
    %270 = vperm.xlu0 %269, %v224
    %v271 = vpop.permute.xlu0 %270
    %274 = vset.pattern.permute.xlu0 0
    %275 = vperm.xlu0 %274, %v225
    %v276 = vpop.permute.xlu0 %275
    %279 = vset.pattern.permute.xlu0 0
    %280 = vperm.xlu0 %279, %v226
    %v281 = vpop.permute.xlu0 %280
    %284 = vset.pattern.permute.xlu0 0
    %285 = vperm.xlu0 %284, %v227
    %v286 = vpop.permute.xlu0 %285
    %289 = vset.pattern.permute.xlu0 0
    %290 = vperm.xlu0 %289, %v228
    %v291 = vpop.permute.xlu0 %290
    %294 = vset.pattern.permute.xlu0 0
    %295 = vperm.xlu0 %294, %v229
    %v296 = vpop.permute.xlu0 %295
    %299 = vset.pattern.permute.xlu0 0
    %300 = vperm.xlu0 %299, %v230
    %v301 = vpop.permute.xlu0 %300
    %304 = vset.pattern.permute.xlu0 0
    %305 = vperm.xlu0 %304, %v231
    %v306 = vpop.permute.xlu0 %305
    %309 = vset.pattern.permute.xlu0 0
    %310 = vperm.xlu0 %309, %v232
    %v311 = vpop.permute.xlu0 %310
    %v329 = vunpack.c.l.b16 %v201
    %v330 = vunpack.c.l.b16 %v202
    %v331 = vunpack.c.l.b16 %v203
    %v332 = vunpack.c.l.b16 %v204
    %v333 = vunpack.c.l.b16 %v205
    %v334 = vunpack.c.l.b16 %v206
    %v335 = vunpack.c.l.b16 %v207
    %v336 = vunpack.c.l.b16 %v208
    %v337 = vunpack.c.l.b16 %v209
    %v338 = vunpack.c.l.b16 %v210
    %v339 = vunpack.c.l.b16 %v211
    %v340 = vunpack.c.l.b16 %v212
    %v341 = vunpack.c.l.b16 %v213
    %v342 = vunpack.c.l.b16 %v214
    %v343 = vunpack.c.l.b16 %v215
    %v344 = vunpack.c.l.b16 %v216
    %v345 = vpack.c.b16 %v330, %v329
    %v346 = vpack.c.b16 %v332, %v331
    %v347 = vpack.c.b16 %v334, %v333
    %v348 = vpack.c.b16 %v336, %v335
    %v349 = vpack.c.b16 %v338, %v337
    %v350 = vpack.c.b16 %v340, %v339
    %v351 = vpack.c.b16 %v342, %v341
    %v352 = vpack.c.b16 %v344, %v343
    %vm353 = vcmask 523264
    %v355 = vsel %vm353, %v345, 0
    %v358 = vsel %vm353, %v346, 0
    %v361 = vsel %vm353, %v347, 0
    %v364 = vsel %vm353, %v348, 0
    %v367 = vsel %vm353, %v349, 0
    %v370 = vsel %vm353, %v350, 0
    %v373 = vsel %vm353, %v351, 0
    %v376 = vsel %vm353, %v352, 0
    %378 = vmatprep.subr.bf16.mxu0 0
    %379 = vmatpush1.bf16.msra.mxu0 %v197
    %380 = vmatprep.subr.bf16.mxu0 0
    %381 = vmatpush1.bf16.msra.mxu0 %v198
    %382 = vmatprep.subr.bf16.mxu0 0
    %383 = vmatpush1.bf16.msra.mxu0 %v199
    %384 = vmatprep.subr.bf16.mxu0 0
    %385 = vmatpush1.bf16.msra.mxu0 %v200
    %386 = vmatprep.subr.bf16.mxu0 0
    %387 = vmatpush1.bf16.msra.mxu0 0
    %388 = vmatprep.subr.bf16.mxu0 0
    %389 = vmatpush1.bf16.msra.mxu0 0
    %390 = vmatprep.subr.bf16.mxu0 0
    %391 = vmatpush1.bf16.msra.mxu0 0
    %392 = vmatprep.subr.bf16.mxu0 0
    %393 = vmatpush1.bf16.msra.mxu0 0
    %394 = vmatprep.subr.bf16.mxu0 0
    %395 = vmatpush1.bf16.msra.mxu0 0
    %396 = vmatprep.subr.bf16.mxu0 0
    %397 = vmatpush1.bf16.msra.mxu0 0
    %398 = vmatprep.subr.bf16.mxu0 0
    %399 = vmatpush1.bf16.msra.mxu0 0
    %400 = vmatprep.subr.bf16.mxu0 0
    %401 = vmatpush1.bf16.msra.mxu0 0
    %402 = vmatprep.subr.bf16.mxu0 0
    %403 = vmatpush1.bf16.msra.mxu0 0
    %404 = vmatprep.subr.bf16.mxu0 0
    %405 = vmatpush1.bf16.msra.mxu0 0
    %406 = vmatprep.subr.bf16.mxu0 0
    %407 = vmatpush1.bf16.msra.mxu0 0
    %408 = vmatprep.subr.bf16.mxu0 0
    %409 = vmatpush1.bf16.msra.mxu0 0
    %410 = vmatprep.mubr.bf16.mxu0 0
    %411 = vmatmul.mubr.bf16.gmra.mrb[0].mxu0 %v355
    %v412 = vpop.f32.mrb[0].mxu0
    %v413 = vadd.f32 %v236, %v412
    %v414 = vpop.f32.mrb[0].mxu0
    %v415 = vpop.f32.mrb[0].mxu0
    %v416 = vadd.f32 %v241, %v415
    %v417 = vpop.f32.mrb[0].mxu0
    %418 = vmatprep.mubr.bf16.mxu0 0
    %419 = vmatmul.mubr.bf16.gmra.mrb[0].mxu0 %v358
    %v420 = vpop.f32.mrb[0].mxu0
    %v421 = vadd.f32 %v246, %v420
    %v422 = vpop.f32.mrb[0].mxu0
    %v423 = vpop.f32.mrb[0].mxu0
    %v424 = vadd.f32 %v251, %v423
    %v425 = vpop.f32.mrb[0].mxu0
    %426 = vmatprep.mubr.bf16.mxu0 0
    %427 = vmatmul.mubr.bf16.gmra.mrb[0].mxu0 %v361
    %v428 = vpop.f32.mrb[0].mxu0
    %v429 = vadd.f32 %v256, %v428
    %v430 = vpop.f32.mrb[0].mxu0
    %v431 = vpop.f32.mrb[0].mxu0
    %v432 = vadd.f32 %v261, %v431
    %v433 = vpop.f32.mrb[0].mxu0
    %434 = vmatprep.mubr.bf16.mxu0 0
    %435 = vmatmul.mubr.bf16.gmra.mrb[0].mxu0 %v364
    %v436 = vpop.f32.mrb[0].mxu0
    %v437 = vadd.f32 %v266, %v436
    %v438 = vpop.f32.mrb[0].mxu0
    %v439 = vpop.f32.mrb[0].mxu0
    %v440 = vadd.f32 %v271, %v439
    %v441 = vpop.f32.mrb[0].mxu0
    %442 = vmatprep.mubr.bf16.mxu0 0
    %443 = vmatmul.mubr.bf16.gmra.mrb[0].mxu0 %v367
    %v444 = vpop.f32.mrb[0].mxu0
    %v445 = vadd.f32 %v276, %v444
    %v446 = vpop.f32.mrb[0].mxu0
    %v447 = vpop.f32.mrb[0].mxu0
    %v448 = vadd.f32 %v281, %v447
    %v449 = vpop.f32.mrb[0].mxu0
    %450 = vmatprep.mubr.bf16.mxu0 0
    %451 = vmatmul.mubr.bf16.gmra.mrb[0].mxu0 %v370
    %v452 = vpop.f32.mrb[0].mxu0
    %v453 = vadd.f32 %v286, %v452
    %v454 = vpop.f32.mrb[0].mxu0
    %v455 = vpop.f32.mrb[0].mxu0
    %v456 = vadd.f32 %v291, %v455
    %v457 = vpop.f32.mrb[0].mxu0
    %458 = vmatprep.mubr.bf16.mxu0 0
    %459 = vmatmul.mubr.bf16.gmra.mrb[0].mxu0 %v373
    %v460 = vpop.f32.mrb[0].mxu0
    %v461 = vadd.f32 %v296, %v460
    %v462 = vpop.f32.mrb[0].mxu0
    %v463 = vpop.f32.mrb[0].mxu0
    %v464 = vadd.f32 %v301, %v463
    %v465 = vpop.f32.mrb[0].mxu0
    %466 = vmatprep.mubr.bf16.mxu0 0
    %467 = vmatmul.mubr.bf16.gmra.mrb[0].mxu0 %v376
    %v468 = vpop.f32.mrb[0].mxu0
    %v469 = vadd.f32 %v306, %v468
    %v470 = vpop.f32.mrb[0].mxu0
    %v471 = vpop.f32.mrb[0].mxu0
    %v472 = vadd.f32 %v311, %v471
    %v473 = vpop.f32.mrb[0].mxu0
    %474 = vdwg.mxu0
    %v475 = vmax.f32 %v413, 0.0
    %v476 = vmax.f32 %v416, 0.0
    %v477 = vmax.f32 %v421, 0.0
    %v478 = vmax.f32 %v424, 0.0
    %v479 = vmax.f32 %v429, 0.0
    %v480 = vmax.f32 %v432, 0.0
    %v481 = vmax.f32 %v437, 0.0
    %v482 = vmax.f32 %v440, 0.0
    %v483 = vmax.f32 %v445, 0.0
    %v484 = vmax.f32 %v448, 0.0
    %v485 = vmax.f32 %v453, 0.0
    %v486 = vmax.f32 %v456, 0.0
    %v487 = vmax.f32 %v461, 0.0
    %v488 = vmax.f32 %v464, 0.0
    %v489 = vmax.f32 %v469, 0.0
    %v490 = vmax.f32 %v472, 0.0
    %v491 = vpack.c.bf16 %v476, %v475
    %v492 = vpack.c.bf16 %v478, %v477
    %v493 = vpack.c.bf16 %v480, %v479
    %v494 = vpack.c.bf16 %v482, %v481
    %v495 = vpack.c.bf16 %v484, %v483
    %v496 = vpack.c.bf16 %v486, %v485
    %v497 = vpack.c.bf16 %v488, %v487
    %v498 = vpack.c.bf16 %v490, %v489
    %v499 = vld [vmem:[%s5] sm:$0x1]
    %v500 = vld [vmem:[#allocation2] sm:$0x1]
    %502 = vset.pattern.permute.xlu0 0
    %503 = vperm.xlu0 %502, %v500
    %v504 = vpop.permute.xlu0 %503
    %v506 = vlaneseq
    %v507 = vshrl.u32 %v506, 7
    %v508 = vsub.s32 0, %v507
    %v509 = vrot.slane %v504, %v508
    %510 = vmatprep.subr.bf16.mxu0 0
    %511 = vmatpush1.bf16.msra.mxu0 %v491
    %512 = vmatprep.subr.bf16.mxu0 0
    %513 = vmatpush1.bf16.msra.mxu0 %v492
    %514 = vmatprep.subr.bf16.mxu0 0
    %515 = vmatpush1.bf16.msra.mxu0 %v493
    %516 = vmatprep.subr.bf16.mxu0 0
    %517 = vmatpush1.bf16.msra.mxu0 %v494
    %518 = vmatprep.subr.bf16.mxu0 0
    %519 = vmatpush1.bf16.msra.mxu0 %v495
    %520 = vmatprep.subr.bf16.mxu0 0
    %521 = vmatpush1.bf16.msra.mxu0 %v496
    %522 = vmatprep.subr.bf16.mxu0 0
    %523 = vmatpush1.bf16.msra.mxu0 %v497
    %524 = vmatprep.subr.bf16.mxu0 0
    %525 = vmatpush1.bf16.msra.mxu0 %v498
    %526 = vmatprep.subr.bf16.mxu0 0
    %527 = vmatpush1.bf16.msra.mxu0 0
    %528 = vmatprep.subr.bf16.mxu0 0
    %529 = vmatpush1.bf16.msra.mxu0 0
    %530 = vmatprep.subr.bf16.mxu0 0
    %531 = vmatpush1.bf16.msra.mxu0 0
    %532 = vmatprep.subr.bf16.mxu0 0
    %533 = vmatpush1.bf16.msra.mxu0 0
    %534 = vmatprep.subr.bf16.mxu0 0
    %535 = vmatpush1.bf16.msra.mxu0 0
    %536 = vmatprep.subr.bf16.mxu0 0
    %537 = vmatpush1.bf16.msra.mxu0 0
    %538 = vmatprep.subr.bf16.mxu0 0
    %539 = vmatpush1.bf16.msra.mxu0 0
    %540 = vmatprep.subr.bf16.mxu0 0
    %541 = vmatpush1.bf16.msra.mxu0 0
    %542 = vmatprep.mubr.bf16.mxu0 0
    %543 = vmatmul.mubr.bf16.gmra.mrb[0].mxu0 %v499
    %v544 = vpop.f32.mrb[0].mxu0
    %v545 = vadd.f32 %v509, %v544
    %v546 = vpop.f32.mrb[0].mxu0
    %v547 = vpop.f32.mrb[0].mxu0
    %v548 = vpop.f32.mrb[0].mxu0
    %549 = vdwg.mxu0
    %v550 = vsub.f32 0.0, %v545
    %v551 = vmul.f32 %v550, 1.442695
    %v552 = vpow.pop %v551
    %v553 = vadd.f32 %v552, 1.0
    %v554 = vrcp.pop %v553
    %v555 = vmul.f32 1.0, %v554
    %556 = vst [vmem:[#allocation3] sm:$0x1] %v555
    %v557 = vsub.f32 1.0, %v555
    %558 = vst [vmem:[#allocation3 + $0x1] sm:$0x1] %v557
    // Predicated region
    $region30: #{tpu_custom_call.1} parent=1 // pred_check
      _
    $region31: #{tpu_custom_call.1} parent=1 // pred_check_branch
      %560 = sbr.rel (0) target = $region33
    $region32: #{tpu_custom_call.1} parent=1 // pred_region
      %s562 = ssub.s32 32, 32
      %563 = vsyncadd [#allocation4], %s562
      %s565 = sshll.u32 [#allocation3], 4
      %s566 = int_to_ptr.vmem [resolvable:$true] %s565
      %568 = dma.vmem_to_hbm [thread:$0]  %s566, 32, %s7, [#allocation4]
    $region33: #{tpu_custom_call.1} parent=1 // pred_fallthru
      _
    // Predicated region
    $region34: #{tpu_custom_call.1} parent=1 // pred_check
      _
    $region35: #{tpu_custom_call.1} parent=1 // pred_check_branch
      %570 = sbr.rel (0) target = $region37
    $region36: #{tpu_custom_call.1} parent=1 // pred_region
      %571 = dma.done [#allocation4], 32
    $region37: #{tpu_custom_call.1} parent=1 // pred_fallthru
      _
    %572 = vsyncpa [#allocation4], 1

</llo_original>
